<compile_context>
chip_gen: v7x
topology: tpu7x:2x2x1
jax: 0.10.0
libtpu: 0.0.40
codegen_flags: <defaults>
</compile_context>

<pallas_src>
import jax
import jax.numpy as jnp
from jax import lax
from jax.experimental import pallas as pl
from jax.experimental.pallas import tpu as pltpu


def _round_up(x: int, m: int) -> int:
    return ((x + m - 1) // m) * m


# ----------------------------------------------------------------------------
# Encoder kernel: partial sums of x @ W1.T over D tiles.
# grid = (P, D_pad // (P * tk)). Axis 0 is "parallel" (megacore-shardable),
# axis 1 is the reduction ("arbitrary"); each parallel slice accumulates
# directly into its own resident (B, H) output block -- no VMEM scratch.
# ----------------------------------------------------------------------------
def _encoder_partial_kernel(x_ref, w1_ref, part_ref):
    @pl.when(pl.program_id(1) == 0)
    def _():
        part_ref[...] = jnp.zeros_like(part_ref)

    # (B, tk) . (H, tk) contracting the lane (D) dim of both -> (B, H), f32 acc.
    part_ref[...] += lax.dot_general(
        x_ref[...],
        w1_ref[...],
        dimension_numbers=(((1,), (1,)), ((), ())),
        preferred_element_type=jnp.float32,
    )


# ----------------------------------------------------------------------------
# Decoder kernel: y_tile = relu(h @ W2[:, tile] + b2[tile]).
# Fully parallel over large, lane-dense output tiles.
# ----------------------------------------------------------------------------
def _decoder_kernel(h_ref, w2_ref, b2_ref, o_ref):
    y = jnp.dot(h_ref[...], w2_ref[...], preferred_element_type=jnp.float32)
    o_ref[...] = jnp.maximum(y + b2_ref[...], 0.0).astype(o_ref.dtype)


def fc_autoencoder_forward(x, w1, b1, w2, b2, *, tk=65536, tn=65536,
                           num_partials=2):
    """Forward pass: relu(relu(x @ w1.T + b1) @ w2 + b2).

    x : (B, D)   input batch
    w1: (H, D)   == PyTorch FC1.weight
    b1: (1, H)   (or (H,))
    w2: (H, D)   == PyTorch FC2.weight.T
    b2: (1, D)   (or (D,))

    tk / tn are the encoder / decoder tile widths along D (multiples of 128).
    D need not be divisible by anything: arrays are zero-padded along D to a
    lane-aligned multiple of the tile and the output is sliced back to D.
    """
    B, D = x.shape
    H = w1.shape[0]
    assert w1.shape == (H, D) and w2.shape == (H, D)
    assert b1.shape[-1] == H and b2.shape[-1] == D

    P = int(num_partials)

    # ---------------- encoder: partial sums of x @ W1.T ---------------------
    tk_eff = min(tk, _round_up(pl.cdiv(D, P), 128))
    d_pad_enc = _round_up(D, P * tk_eff)
    n_k = d_pad_enc // (P * tk_eff)

    x_p = x if d_pad_enc == D else jnp.pad(x, ((0, 0), (0, d_pad_enc - D)))
    w1_p = w1 if d_pad_enc == D else jnp.pad(w1, ((0, 0), (0, d_pad_enc - D)))

    # Per-step double-buffered VMEM (f32): (B + H) * tk_eff * 4 * 2 bytes
    # -> ~12.6 MB at tk=65536 with B=8, H=16: fits v5e/v6e/v7x comfortably.
    # TODO(synk): if xprof shows exposed DMA, add pipeline_mode=pl.Buffered(3)
    # on the x / w1 streams.
    partials = pl.pallas_call(
        _encoder_partial_kernel,
        out_shape=jax.ShapeDtypeStruct((P, B, H), jnp.float32),
        grid_spec=pltpu.PrefetchScalarGridSpec(
            num_scalar_prefetch=0,
            grid=(P, n_k),
            in_specs=[
                pl.BlockSpec((B, tk_eff), lambda p, k: (0, p * n_k + k)),
                pl.BlockSpec((H, tk_eff), lambda p, k: (0, p * n_k + k)),
            ],
            out_specs=pl.BlockSpec((None, B, H), lambda p, k: (p, 0, 0)),
        ),
        compiler_params=pltpu.CompilerParams(
            dimension_semantics=("parallel", "arbitrary"),
            vmem_limit_bytes=64 * 1024 * 1024,
        ),
    )(x_p, w1_p)

    # Tiny (P, B, H) epilogue: combine partial sums, add bias, ReLU.
    h = jnp.maximum(jnp.sum(partials, axis=0) + b1.reshape(1, H), 0.0)

    # ---------------- decoder: y = relu(h @ W2 + b2) ------------------------
    tn_eff = min(tn, _round_up(D, 128))
    d_pad_dec = _round_up(D, tn_eff)

    w2_p = w2 if d_pad_dec == D else jnp.pad(w2, ((0, 0), (0, d_pad_dec - D)))
    b2_2d = b2.reshape(1, D)
    b2_p = b2_2d if d_pad_dec == D else jnp.pad(
        b2_2d, ((0, 0), (0, d_pad_dec - D)))

    y = pl.pallas_call(
        _decoder_kernel,
        out_shape=jax.ShapeDtypeStruct((B, d_pad_dec), x.dtype),
        grid_spec=pltpu.PrefetchScalarGridSpec(
            num_scalar_prefetch=0,
            grid=(d_pad_dec // tn_eff,),
            in_specs=[
                pl.BlockSpec((B, H), lambda j: (0, 0)),        # full hidden
                pl.BlockSpec((H, tn_eff), lambda j: (0, j)),   # W2 tile (lane-dense)
                pl.BlockSpec((1, tn_eff), lambda j: (0, j)),   # b2 tile
            ],
            out_specs=pl.BlockSpec((B, tn_eff), lambda j: (0, j)),
        ),
        compiler_params=pltpu.CompilerParams(
            dimension_semantics=("parallel",),
            vmem_limit_bytes=64 * 1024 * 1024,
        ),
    )(h, w2_p, b2_p)

    return y if d_pad_dec == D else y[:, :D]


def _ref_forward(x, w1, b1, w2, b2):
    h = jnp.maximum(x @ w1.T + b1.reshape(1, -1), 0.0)
    return jnp.maximum(h @ w2 + b2.reshape(1, -1), 0.0)


if __name__ == "__main__":
    # Small stand-in for the real module (D = 2064*2073 = 4,278,672, H = 16).
    # D is intentionally NOT a multiple of 128 to exercise the padding path
    # that the production shape requires.
    B, D, H = 8, 6192, 16

    key = jax.random.PRNGKey(0)
    kx, k1, k2, k3, k4 = jax.random.split(key, 5)

    x = jax.random.normal(kx, (B, D), dtype=jnp.float32)

    # nn.Linear-style U(-1/sqrt(fan_in), 1/sqrt(fan_in)) init.
    bound1 = 1.0 / jnp.sqrt(jnp.float32(D))
    w1 = jax.random.uniform(k1, (H, D), jnp.float32, -bound1, bound1)  # FC1.weight
    b1 = jax.random.uniform(k2, (1, H), jnp.float32, -bound1, bound1)

    bound2 = 1.0 / jnp.sqrt(jnp.float32(H))
    w2 = jax.random.uniform(k3, (H, D), jnp.float32, -bound2, bound2)  # FC2.weight.T
    b2 = jax.random.uniform(k4, (1, D), jnp.float32, -bound2, bound2)

    out = jax.block_until_ready(fc_autoencoder_forward(x, w1, b1, w2, b2))

    ref = _ref_forward(x, w1, b1, w2, b2)
    assert out.shape == (B, D)
    assert jnp.allclose(out, ref, atol=1e-3, rtol=1e-3), float(
        jnp.max(jnp.abs(out - ref)))

    # TODO(synk): nn.MSELoss (self.loss_fn) is not part of forward(); not implemented.
    print("KERNEL_OK")
</pallas_src>

<mosaic_0001>
module attributes {stable_mosaic.version = 11 : i64} {
  func.func @_encoder_partial_kernel(%arg0: i32, %arg1: i32, %arg2: memref<8x3200xf32, #tpu.memory_space<vmem>>, %arg3: memref<16x3200xf32, #tpu.memory_space<vmem>>, %arg4: memref<1x8x16xf32, #tpu.memory_space<vmem>>) attributes {dimension_semantics = [#tpu.dimension_semantics<parallel>, #tpu.dimension_semantics<arbitrary>], iteration_bounds = array<i64: 2, 1>, scalar_prefetch = 0 : i64, scratch_operands = 0 : i64, tpu.core_type = #tpu.core_type<tc>, window_params = [{transform_indices = @transform_0, window_bounds = array<i64: 8, 3200>}, {transform_indices = @transform_1, window_bounds = array<i64: 16, 3200>}, {transform_indices = @transform_2, window_bounds = array<i64: 1, 8, 16>}]} {
    %c0_i32 = arith.constant 0 : i32
    %0 = arith.cmpi eq, %arg1, %c0_i32 : i32
    %1 = arith.extui %0 : i1 to i32
    %c0_i32_0 = arith.constant 0 : i32
    %2 = arith.cmpi ne, %1, %c0_i32_0 : i32
    scf.if %2 {
      %cst_10 = arith.constant 0.000000e+00 : f32
      %12 = vector.broadcast %cst_10 : f32 to vector<8x16xf32>
      %c0_11 = arith.constant 0 : index
      %c0_12 = arith.constant 0 : index
      %c0_13 = arith.constant 0 : index
      %13 = vector.load %arg4[%c0_11, %c0_12, %c0_13] : memref<1x8x16xf32, #tpu.memory_space<vmem>>, vector<1x8x16xf32>
      %14 = vector.shape_cast %13 : vector<1x8x16xf32> to vector<8x16xf32>
      %15 = vector.shape_cast %12 : vector<8x16xf32> to vector<1x8x16xf32>
      tpu.vector_store %arg4[%c0_11, %c0_12, %c0_13], %15 {strides = array<i32>} : memref<1x8x16xf32, #tpu.memory_space<vmem>>, vector<1x8x16xf32>,
    } else {
    }
    %c0 = arith.constant 0 : index
    %c0_1 = arith.constant 0 : index
    %c0_2 = arith.constant 0 : index
    %3 = vector.load %arg4[%c0, %c0_1, %c0_2] : memref<1x8x16xf32, #tpu.memory_space<vmem>>, vector<1x8x16xf32>
    %4 = vector.shape_cast %3 : vector<1x8x16xf32> to vector<8x16xf32>
    %c0_3 = arith.constant 0 : index
    %c0_4 = arith.constant 0 : index
    %5 = vector.load %arg2[%c0_3, %c0_4] : memref<8x3200xf32, #tpu.memory_space<vmem>>, vector<8x3200xf32>
    %c0_5 = arith.constant 0 : index
    %c0_6 = arith.constant 0 : index
    %6 = vector.load %arg3[%c0_5, %c0_6] : memref<16x3200xf32, #tpu.memory_space<vmem>>, vector<16x3200xf32>
    %cst = arith.constant dense<0.000000e+00> : vector<8x16xf32>
    %7 = tpu.matmul %5, %6, %cst {dimension_numbers = #tpu.dot_dimension_numbers<[1], [1], [0], [0], [0, 0, 1, 0], [], []>} : vector<8x3200xf32>, vector<16x3200xf32>, vector<8x16xf32> -> vector<8x16xf32>
    %8 = arith.addf %4, %7 : vector<8x16xf32>
    %c0_7 = arith.constant 0 : index
    %c0_8 = arith.constant 0 : index
    %c0_9 = arith.constant 0 : index
    %9 = vector.load %arg4[%c0_7, %c0_8, %c0_9] : memref<1x8x16xf32, #tpu.memory_space<vmem>>, vector<1x8x16xf32>
    %10 = vector.shape_cast %9 : vector<1x8x16xf32> to vector<8x16xf32>
    %11 = vector.shape_cast %8 : vector<8x16xf32> to vector<1x8x16xf32>
    tpu.vector_store %arg4[%c0_7, %c0_8, %c0_9], %11 {strides = array<i32>} : memref<1x8x16xf32, #tpu.memory_space<vmem>>, vector<1x8x16xf32>,
    return
  }
  func.func @transform_0(%arg0: i32, %arg1: i32) -> (i32, i32) {
    %c1_i32 = arith.constant 1 : i32
    %0 = arith.muli %arg0, %c1_i32 : i32
    %1 = arith.addi %0, %arg1 : i32
    %c0_i32 = arith.constant 0 : i32
    %c0_i32_0 = arith.constant 0 : i32
    return %c0_i32, %1 : i32, i32
  }
  func.func @transform_1(%arg0: i32, %arg1: i32) -> (i32, i32) {
    %c1_i32 = arith.constant 1 : i32
    %0 = arith.muli %arg0, %c1_i32 : i32
    %1 = arith.addi %0, %arg1 : i32
    %c0_i32 = arith.constant 0 : i32
    %c0_i32_0 = arith.constant 0 : i32
    return %c0_i32, %1 : i32, i32
  }
  func.func @transform_2(%arg0: i32, %arg1: i32) -> (i32, i32, i32) {
    %c0_i32 = arith.constant 0 : i32
    %c0_i32_0 = arith.constant 0 : i32
    %c0_i32_1 = arith.constant 0 : i32
    return %arg0, %c0_i32, %c0_i32_0 : i32, i32, i32
  }
}

</mosaic_0001>

<llo_original>
// kernel: tpu_custom_call.1
$region0: #{tpu_custom_call.1}
  #allocation0 [shape = 'u32[]', space=smem, size = 0x4, offset = 0x4, fixed_abs, tag = 'smem constant byte address 0x4 - core index']
  #allocation1 [shape = 'u32[144,128]{1,0:T(1,128)}', space=vmem, size = 0x12000, scoped, tag = 'internal scratch']
  %s0 = inlined_call_operand.hbm [shape: f32[8,6400], index: 0, kind: input, shape index: {}]
  %s1 = inlined_call_operand.hbm [shape: f32[16,6400], index: 1, kind: input, shape index: {}]
  %s2 = inlined_call_operand.hbm [shape: f32[2,8,16], index: 2, kind: output, shape index: {}]
  %s3 = sld [smem:[#allocation0]]
  $region53: #{tpu_custom_call.1} parent=0
    _
  %s5 = ssub.s32 1, %s3
  %s6 = scalar_select 0, %s5, %s3
  $region1: #{tpu_custom_call.1} parent=0
    #allocation2 [shape = 'u8[204800]{0}', space=vmem, size = 0x32000, scoped, tag = 'input window, operand 0']
    #allocation3 [shape = 's32[2]{0}', space=sflag, size = 0x8, scoped, tag = 'scoped memory for tpu_custom_call.1']
    #allocation4 [shape = 's32[2]{0}', space=sflag, size = 0x8, scoped, tag = 'scoped memory for tpu_custom_call.1']
    #allocation5 [shape = 'u8[409600]{0}', space=vmem, size = 0x64000, scoped, tag = 'input window, operand 1']
    #allocation6 [shape = 's32[2]{0}', space=sflag, size = 0x8, scoped, tag = 'scoped memory for tpu_custom_call.1']
    #allocation7 [shape = 'u8[8192]{0}', space=vmem, size = 0x2000, scoped, tag = 'output window, operand 0']
    %7 = vsyncpa [#allocation3], 0
    %s8 = scalar_lea.sflag [#allocation3], 1
    %9 = vsyncpa %s8, 0
    %10 = vsyncpa [#allocation6], 0
    %s11 = scalar_lea.sflag [#allocation6], 1
    %12 = vsyncpa %s11, 0
    %13 = vsyncpa [#allocation4], 0
    %s14 = scalar_lea.sflag [#allocation4], 1
    %15 = vsyncpa %s14, 0
    loop: start=0, step=1, limit=4
    $region2: #{tpu_custom_call.1} parent=1 // loop_pre_header
      _
    $region3: #{tpu_custom_call.1} parent=1 // loop_header
      %s17 = sphi 0, %s21
      %p18 = scmp.ge.s32.totalorder %s17, 4
      %s24 = sphi 0, %s36
      %s25 = sphi 0, %s32
      %s26 = sphi 0, %s24
      %s27 = sphi 0, %s25
      %s28 = sphi 0, %s26
      %s29 = sphi 0, %s27
      %s41 = sphi 0, %s43
      %s44 = sphi 0, %s41
      %s45 = sphi 0, %s44
      %s61 = sphi 0, %s45
      %s69 = sphi 0, %s71
      %s72 = sphi 0, %s69
      %s73 = sphi 0, %s72
      %s89 = sphi 0, %s73
      %s95 = sphi 0, %s97
      %s98 = sphi 0, %s95
      %s99 = sphi 0, %s98
      %s115 = sphi 0, %s99
    $region4: #{tpu_custom_call.1} parent=1 // loop_header_branch
      %20 = sbr.rel (%p18) target = $region8
    $region5: #{tpu_custom_call.1} parent=1 // loop_body
      %s22 = ssub.s32 %s17, 1
      %s23 = ssub.s32 %s17, 2
      %s30 = sadd.s32 1, %s25
      %p31 = scmp.ge.s32.totalorder %s30, 1
      %s32 = scalar_select %p31, 0, %s30
      %s33 = sadd.s32 1, %s24
      %s34 = scalar_select %p31, %s33, %s24
      %p35 = scmp.ge.s32.totalorder %s34, 2
      %s36 = scalar_select %p35, 0, %s34
      %s37 = sadd.s32 %s24, %s25
      %s38 = sadd.s32 %s36, %s32
      %s39 = ssub.s32 %s37, %s38
      %p40 = scmp.eq.s32.totalorder %s39, 0
      %s42 = sadd.s32 %s41, 1
      %s43 = scalar_select %p40, %s41, %s42
      %p46 = pneg %p40
      %p47 = scmp.eq.s32.totalorder %s17, 1
      %p48 = por %p46, %p47
      %p49 = scmp.ne.s32.totalorder %s41, %s44
      %p50 = scmp.eq.s32.totalorder %s17, 0
      %p51 = por %p49, %p50
      %p52 = scmp.ne.s32.totalorder %s41, %s44
      %p53 = scmp.eq.s32.totalorder %s22, 1
      %p54 = por %p52, %p53
      %p55 = scmp.ne.s32.totalorder %s44, %s45
      %p56 = scmp.eq.s32.totalorder %s22, 0
      %p57 = por %p55, %p56
      %p58 = scmp.ne.s32.totalorder %s44, %s45
      %p59 = scmp.eq.s32.totalorder %s23, 1
      %p60 = por %p58, %p59
      %p62 = scmp.ne.s32.totalorder %s45, %s61
      %p63 = scmp.eq.s32.totalorder %s23, 0
      %p64 = por %p62, %p63
      %s65 = sadd.s32 %s24, %s25
      %s66 = sadd.s32 %s36, %s32
      %s67 = ssub.s32 %s65, %s66
      %p68 = scmp.eq.s32.totalorder %s67, 0
      %s70 = sadd.s32 %s69, 1
      %s71 = scalar_select %p68, %s69, %s70
      %p74 = pneg %p68
      %p75 = scmp.eq.s32.totalorder %s17, 1
      %p76 = por %p74, %p75
      %p77 = scmp.ne.s32.totalorder %s69, %s72
      %p78 = scmp.eq.s32.totalorder %s17, 0
      %p79 = por %p77, %p78
      %p80 = scmp.ne.s32.totalorder %s69, %s72
      %p81 = scmp.eq.s32.totalorder %s22, 1
      %p82 = por %p80, %p81
      %p83 = scmp.ne.s32.totalorder %s72, %s73
      %p84 = scmp.eq.s32.totalorder %s22, 0
      %p85 = por %p83, %p84
      %p86 = scmp.ne.s32.totalorder %s72, %s73
      %p87 = scmp.eq.s32.totalorder %s23, 1
      %p88 = por %p86, %p87
      %p90 = scmp.ne.s32.totalorder %s73, %s89
      %p91 = scmp.eq.s32.totalorder %s23, 0
      %p92 = por %p90, %p91
      %s93 = ssub.s32 %s24, %s36
      %p94 = scmp.eq.s32.totalorder %s93, 0
      %s96 = sadd.s32 %s95, 1
      %s97 = scalar_select %p94, %s95, %s96
      %p100 = pneg %p94
      %p101 = scmp.eq.s32.totalorder %s17, 1
      %p102 = por %p100, %p101
      %p103 = scmp.ne.s32.totalorder %s95, %s98
      %p104 = scmp.eq.s32.totalorder %s17, 0
      %p105 = por %p103, %p104
      %p106 = scmp.ne.s32.totalorder %s95, %s98
      %p107 = scmp.eq.s32.totalorder %s22, 1
      %p108 = por %p106, %p107
      %p109 = scmp.ne.s32.totalorder %s98, %s99
      %p110 = scmp.eq.s32.totalorder %s22, 0
      %p111 = por %p109, %p110
      %p112 = scmp.ne.s32.totalorder %s98, %s99
      %p113 = scmp.eq.s32.totalorder %s23, 1
      %p114 = por %p112, %p113
      %p116 = scmp.ne.s32.totalorder %s99, %s115
      %p117 = scmp.eq.s32.totalorder %s23, 0
      %p118 = por %p116, %p117
      %p119 = scmp.le.s32.totalorder 1, %s17
      %p120 = scmp.lt.s32.totalorder %s17, 3
      %p121 = pnand %p119, %p120
      %p122 = pneg %p121
      // Predicated region
      $region9: #{tpu_custom_call.1} parent=5 // pred_check
        _
      $region10: #{tpu_custom_call.1} parent=5 // pred_check_branch
        %124 = sbr.rel (%p121) target = $region12
      $region11: #{tpu_custom_call.1} parent=5 // pred_region
        %s125 = ssub.s32 %s17, 1
      $region12: #{tpu_custom_call.1} parent=5 // pred_fallthru
        _
      %p126 = scmp.lt.s32.totalorder %s17, 2
      // Predicated region
      $region13: #{tpu_custom_call.1} parent=5 // pred_check
        %p127 = pneg %p126
      $region14: #{tpu_custom_call.1} parent=5 // pred_check_branch
        %129 = sbr.rel (%p127) target = $region16
      $region15: #{tpu_custom_call.1} parent=5 // pred_region
        // Predicated region
        $region17: #{tpu_custom_call.1} parent=15 // pred_check
          %p130 = pneg %p51
        $region18: #{tpu_custom_call.1} parent=15 // pred_check_branch
          %132 = sbr.rel (%p130) target = $region20
        $region19: #{tpu_custom_call.1} parent=15 // pred_region
          %s133 = sand.u32 %s41, 1
          %s134 = scalar_lea.sflag [#allocation3], %s133
          %s135 = sand.u32 %s41, 1
          %s136 = smul.addr %s135, 200
          %s137 = scalar_lea.vmem [#allocation2], %s136
          %s138 = sadd.s32 %s24, %s25
          %s139 = smul.u32 25, %s138
          %s141 = ssub.s32 3200, 3200
          %142 = vsyncadd %s134, %s141
          %s143 = smul.addr %s139, 128
          %s144 = scalar_lea.hbm %s0, %s143
          %s146 = sshll.u32 %s137, 4
          %s147 = int_to_ptr.vmem [resolvable:$true] %s146
          %149 = dma.hbm_to_vmem [thread:$0]  %s144, 3200, %s147, %s134
        $region20: #{tpu_custom_call.1} parent=15 // pred_fallthru
          _
        // Predicated region
        $region21: #{tpu_custom_call.1} parent=15 // pred_check
          %p150 = pneg %p79
        $region22: #{tpu_custom_call.1} parent=15 // pred_check_branch
          %152 = sbr.rel (%p150) target = $region24
        $region23: #{tpu_custom_call.1} parent=15 // pred_region
          %s153 = sand.u32 %s69, 1
          %s154 = scalar_lea.sflag [#allocation6], %s153
          %s155 = sand.u32 %s69, 1
          %s156 = smul.addr %s155, 400
          %s157 = scalar_lea.vmem [#allocation5], %s156
          %s158 = sadd.s32 %s24, %s25
          %s159 = smul.u32 25, %s158
          %s161 = ssub.s32 6400, 6400
          %162 = vsyncadd %s154, %s161
          %s163 = smul.addr %s159, 128
          %s164 = scalar_lea.hbm %s1, %s163
          %s165 = sshll.u32 %s157, 4
          %s166 = int_to_ptr.vmem [resolvable:$true] %s165
          %171 = dma.hbm_to_vmem [thread:$0]  %s164, 6400, %s166, %s154, 6400, 3200, 200
        $region24: #{tpu_custom_call.1} parent=15 // pred_fallthru
          _
      $region16: #{tpu_custom_call.1} parent=5 // pred_fallthru
        _
      %p172 = scmp.le.s32.totalorder 1, %s17
      %p173 = scmp.lt.s32.totalorder %s17, 3
      %p174 = pnand %p172, %p173
      %p175 = pneg %p174
      // Predicated region
      $region25: #{tpu_custom_call.1} parent=5 // pred_check
        _
      $region26: #{tpu_custom_call.1} parent=5 // pred_check_branch
        %177 = sbr.rel (%p174) target = $region28
      $region27: #{tpu_custom_call.1} parent=5 // pred_region
        %s178 = ssub.s32 %s17, 1
        %s179 = sand.u32 %s44, 1
        %s180 = scalar_lea.sflag [#allocation3], %s179
        %s181 = sand.u32 %s44, 1
        %s182 = smul.addr %s181, 200
        %s183 = scalar_lea.vmem [#allocation2], %s182
        // Predicated region
        $region29: #{tpu_custom_call.1} parent=27 // pred_check
          %p184 = pneg %p57
        $region30: #{tpu_custom_call.1} parent=27 // pred_check_branch
          %186 = sbr.rel (%p184) target = $region32
        $region31: #{tpu_custom_call.1} parent=27 // pred_region
          %187 = dma.done %s180, 3200
        $region32: #{tpu_custom_call.1} parent=27 // pred_fallthru
          _
        %s188 = sand.u32 %s72, 1
        %s189 = scalar_lea.sflag [#allocation6], %s188
        %s190 = sand.u32 %s72, 1
        %s191 = smul.addr %s190, 400
        %s192 = scalar_lea.vmem [#allocation5], %s191
        // Predicated region
        $region33: #{tpu_custom_call.1} parent=27 // pred_check
          %p193 = pneg %p85
        $region34: #{tpu_custom_call.1} parent=27 // pred_check_branch
          %195 = sbr.rel (%p193) target = $region36
        $region35: #{tpu_custom_call.1} parent=27 // pred_region
          %196 = dma.done %s189, 6400
        $region36: #{tpu_custom_call.1} parent=27 // pred_fallthru
          _
        %s197 = sand.u32 %s44, 1
        %s198 = scalar_lea.sflag [#allocation3], %s197
        %s199 = sand.u32 %s44, 1
        %s200 = smul.addr %s199, 200
        %s201 = scalar_lea.vmem [#allocation2], %s200
        %p202 = pneg %p57
        %p203 = pneg %p54
        %s204 = sand.u32 %s72, 1
        %s205 = scalar_lea.sflag [#allocation6], %s204
        %s206 = sand.u32 %s72, 1
        %s207 = smul.addr %s206, 400
        %s208 = scalar_lea.vmem [#allocation5], %s207
        %p209 = pneg %p85
        %p210 = pneg %p82
        %p211 = pneg %p111
        %p212 = pneg %p108
        %s213 = sand.u32 %s98, 1
        %s214 = scalar_lea.sflag [#allocation4], %s213
        %s215 = sand.u32 %s98, 1
        %s216 = smul.addr %s215, 8
        %s217 = scalar_lea.vmem [#allocation7], %s216
        %s218 = sadd.s32 %s26, %s27
        %s219 = smul.u32 25, %s218
        %s220 = sadd.s32 %s26, %s27
        %s221 = smul.u32 25, %s220
        %p222 = scmp.eq.s32.totalorder %s27, 0
        // Predicated region
        $region37: #{tpu_custom_call.1} parent=27 // pred_check
          %p223 = pneg %p222
        $region38: #{tpu_custom_call.1} parent=27 // pred_check_branch
          %225 = sbr.rel (%p223) target = $region40
        $region39: #{tpu_custom_call.1} parent=27 // pred_region
          %vm226 = vcmask 130048
          %227 = vst.msk [vmem:[%s217] sm:$0xff] %vm226, 0.0
        $region40: #{tpu_custom_call.1} parent=27 // pred_fallthru
          _
        %v228 = vld [vmem:[%s217] sm:$0xff]
        %v229 = vld [vmem:[%s183] sm:$0xff]
        %v230 = vld [vmem:[%s183 + $0x8] sm:$0xff]
        %v231 = vld [vmem:[%s183 + $0x10] sm:$0xff]
        %v232 = vld [vmem:[%s183 + $0x18] sm:$0xff]
        %v233 = vld [vmem:[%s183 + $0x20] sm:$0xff]
        %v234 = vld [vmem:[%s183 + $0x28] sm:$0xff]
        %v235 = vld [vmem:[%s183 + $0x30] sm:$0xff]
        %v236 = vld [vmem:[%s183 + $0x38] sm:$0xff]
        %v237 = vld [vmem:[%s183 + $0x40] sm:$0xff]
        %v238 = vld [vmem:[%s183 + $0x48] sm:$0xff]
        %v239 = vld [vmem:[%s183 + $0x50] sm:$0xff]
        %v240 = vld [vmem:[%s183 + $0x58] sm:$0xff]
        %v241 = vld [vmem:[%s183 + $0x60] sm:$0xff]
        %v242 = vld [vmem:[%s183 + $0x68] sm:$0xff]
        %v243 = vld [vmem:[%s183 + $0x70] sm:$0xff]
        %v244 = vld [vmem:[%s183 + $0x78] sm:$0xff]
        %v245 = vld [vmem:[%s183 + $0x80] sm:$0xff]
        %v246 = vld [vmem:[%s183 + $0x88] sm:$0xff]
        %v247 = vld [vmem:[%s183 + $0x90] sm:$0xff]
        %v248 = vld [vmem:[%s183 + $0x98] sm:$0xff]
        %v249 = vld [vmem:[%s183 + $0xa0] sm:$0xff]
        %v250 = vld [vmem:[%s183 + $0xa8] sm:$0xff]
        %v251 = vld [vmem:[%s183 + $0xb0] sm:$0xff]
        %v252 = vld [vmem:[%s183 + $0xb8] sm:$0xff]
        %v253 = vld [vmem:[%s183 + $0xc0] sm:$0xff]
        %v254 = vld [vmem:[%s192] sm:$0xff]
        %v255 = vld [vmem:[%s192 + $0x8] sm:$0xff]
        %v256 = vld [vmem:[%s192 + $0x10] sm:$0xff]
        %v257 = vld [vmem:[%s192 + $0x18] sm:$0xff]
        %v258 = vld [vmem:[%s192 + $0x20] sm:$0xff]
        %v259 = vld [vmem:[%s192 + $0x28] sm:$0xff]
        %v260 = vld [vmem:[%s192 + $0x30] sm:$0xff]
        %v261 = vld [vmem:[%s192 + $0x38] sm:$0xff]
        %v262 = vld [vmem:[%s192 + $0x40] sm:$0xff]
        %v263 = vld [vmem:[%s192 + $0x48] sm:$0xff]
        %v264 = vld [vmem:[%s192 + $0x50] sm:$0xff]
        %v265 = vld [vmem:[%s192 + $0x58] sm:$0xff]
        %v266 = vld [vmem:[%s192 + $0x60] sm:$0xff]
        %v267 = vld [vmem:[%s192 + $0x68] sm:$0xff]
        %v268 = vld [vmem:[%s192 + $0x70] sm:$0xff]
        %v269 = vld [vmem:[%s192 + $0x78] sm:$0xff]
        %v270 = vld [vmem:[%s192 + $0x80] sm:$0xff]
        %v271 = vld [vmem:[%s192 + $0x88] sm:$0xff]
        %v272 = vld [vmem:[%s192 + $0x90] sm:$0xff]
        %v273 = vld [vmem:[%s192 + $0x98] sm:$0xff]
        %v274 = vld [vmem:[%s192 + $0xa0] sm:$0xff]
        %v275 = vld [vmem:[%s192 + $0xa8] sm:$0xff]
        %v276 = vld [vmem:[%s192 + $0xb0] sm:$0xff]
        %v277 = vld [vmem:[%s192 + $0xb8] sm:$0xff]
        %v278 = vld [vmem:[%s192 + $0xc0] sm:$0xff]
        %v279 = vld [vmem:[%s192 + $0xc8] sm:$0xff]
        %v280 = vld [vmem:[%s192 + $0xd0] sm:$0xff]
        %v281 = vld [vmem:[%s192 + $0xd8] sm:$0xff]
        %v282 = vld [vmem:[%s192 + $0xe0] sm:$0xff]
        %v283 = vld [vmem:[%s192 + $0xe8] sm:$0xff]
        %v284 = vld [vmem:[%s192 + $0xf0] sm:$0xff]
        %v285 = vld [vmem:[%s192 + $0xf8] sm:$0xff]
        %v286 = vld [vmem:[%s192 + $0x100] sm:$0xff]
        %v287 = vld [vmem:[%s192 + $0x108] sm:$0xff]
        %v288 = vld [vmem:[%s192 + $0x110] sm:$0xff]
        %v289 = vld [vmem:[%s192 + $0x118] sm:$0xff]
        %v290 = vld [vmem:[%s192 + $0x120] sm:$0xff]
        %v291 = vld [vmem:[%s192 + $0x128] sm:$0xff]
        %v292 = vld [vmem:[%s192 + $0x130] sm:$0xff]
        %v293 = vld [vmem:[%s192 + $0x138] sm:$0xff]
        %v294 = vld [vmem:[%s192 + $0x140] sm:$0xff]
        %v295 = vld [vmem:[%s192 + $0x148] sm:$0xff]
        %v296 = vld [vmem:[%s192 + $0x150] sm:$0xff]
        %v297 = vld [vmem:[%s192 + $0x158] sm:$0xff]
        %v298 = vld [vmem:[%s192 + $0x160] sm:$0xff]
        %v299 = vld [vmem:[%s192 + $0x168] sm:$0xff]
        %v300 = vld [vmem:[%s192 + $0x170] sm:$0xff]
        %v301 = vld [vmem:[%s192 + $0x178] sm:$0xff]
        %v302 = vld [vmem:[%s192 + $0x180] sm:$0xff]
        %v303 = vld [vmem:[%s192 + $0x188] sm:$0xff]
        %304 = vmatprep.subr.mxu0 %v255
        %305 = vmatpush1.xpose.msra.mxu0 %v254
        %306 = vmatprep.subr.mxu0 %v280
        %307 = vmatpush1.xpose.msra.mxu0 %v279
        %308 = vmatprep.subr.mxu0 0.0
        %309 = vmatpush1.xpose.msra.mxu0 0.0
        %310 = vmatprep.subr.mxu0 0.0
        %311 = vmatpush1.xpose.msra.mxu0 0.0
        %312 = vmatprep.subr.mxu0 0.0
        %313 = vmatpush1.xpose.msra.mxu0 0.0
        %314 = vmatprep.subr.mxu0 0.0
        %315 = vmatpush1.xpose.msra.mxu0 0.0
        %316 = vmatprep.subr.mxu0 0.0
        %317 = vmatpush1.xpose.msra.mxu0 0.0
        %318 = vmatprep.subr.mxu0 0.0
        %319 = vmatpush1.xpose.msra.mxu0 0.0
        %320 = vmatprep.subr.mxu0 0.0
        %321 = vmatpush1.xpose.msra.mxu0 0.0
        %322 = vmatprep.subr.mxu0 0.0
        %323 = vmatpush1.xpose.msra.mxu0 0.0
        %324 = vmatprep.subr.mxu0 0.0
        %325 = vmatpush1.xpose.msra.mxu0 0.0
        %326 = vmatprep.subr.mxu0 0.0
        %327 = vmatpush1.xpose.msra.mxu0 0.0
        %328 = vmatprep.subr.mxu0 0.0
        %329 = vmatpush1.xpose.msra.mxu0 0.0
        %330 = vmatprep.subr.mxu0 0.0
        %331 = vmatpush1.xpose.msra.mxu0 0.0
        %332 = vmatprep.subr.mxu0 0.0
        %333 = vmatpush1.xpose.msra.mxu0 0.0
        %334 = vmatprep.subr.mxu0 0.0
        %335 = vmatpush1.xpose.msra.mxu0 0.0
        %336 = vmatprep.subr.mxu0 0.0
        %337 = vmatpush1.xpose.msra.mxu0 0.0
        %338 = vmatprep.subr.mxu0 0.0
        %339 = vmatpush1.xpose.msra.mxu0 0.0
        %340 = vmatprep.subr.mxu0 0.0
        %341 = vmatpush1.xpose.msra.mxu0 0.0
        %342 = vmatprep.subr.mxu0 0.0
        %343 = vmatpush1.xpose.msra.mxu0 0.0
        %344 = vmatprep.subr.mxu0 0.0
        %345 = vmatpush1.xpose.msra.mxu0 0.0
        %346 = vmatprep.subr.mxu0 0.0
        %347 = vmatpush1.xpose.msra.mxu0 0.0
        %348 = vmatprep.subr.mxu0 0.0
        %349 = vmatpush1.xpose.msra.mxu0 0.0
        %350 = vmatprep.subr.mxu0 0.0
        %351 = vmatpush1.xpose.msra.mxu0 0.0
        %352 = vmatprep.subr.mxu0 0.0
        %353 = vmatpush1.xpose.msra.mxu0 0.0
        %354 = vmatprep.subr.mxu0 0.0
        %355 = vmatpush1.xpose.msra.mxu0 0.0
        %356 = vmatprep.subr.mxu0 0.0
        %357 = vmatpush1.xpose.msra.mxu0 0.0
        %358 = vmatprep.subr.mxu0 0.0
        %359 = vmatpush1.xpose.msra.mxu0 0.0
        %360 = vmatprep.subr.mxu0 0.0
        %361 = vmatpush1.xpose.msra.mxu0 0.0
        %362 = vmatprep.subr.mxu0 0.0
        %363 = vmatpush1.xpose.msra.mxu0 0.0
        %364 = vmatprep.subr.mxu0 0.0
        %365 = vmatpush1.xpose.msra.mxu0 0.0
        %366 = vmatprep.subr.mxu0 0.0
        %367 = vmatpush1.xpose.msra.mxu0 0.0
        %368 = vmatprep.mubr.f32.mxu0 %v230
        %369 = vmatmul.mubr.f32.gmra.mrb[0].mxu0 %v229
        %v370 = vpop.f32.mrb[0].mxu0
        %v371 = vadd.f32 0.0, %v370
        %v372 = vpop.f32.mrb[0].mxu0
        %373 = vdwg.mxu0
        %374 = vmatprep.subr.mxu0 %v257
        %375 = vmatpush1.xpose.msra.mxu0 %v256
        %376 = vmatprep.subr.mxu0 %v282
        %377 = vmatpush1.xpose.msra.mxu0 %v281
        %378 = vmatprep.subr.mxu0 0.0
        %379 = vmatpush1.xpose.msra.mxu0 0.0
        %380 = vmatprep.subr.mxu0 0.0
        %381 = vmatpush1.xpose.msra.mxu0 0.0
        %382 = vmatprep.subr.mxu0 0.0
        %383 = vmatpush1.xpose.msra.mxu0 0.0
        %384 = vmatprep.subr.mxu0 0.0
        %385 = vmatpush1.xpose.msra.mxu0 0.0
        %386 = vmatprep.subr.mxu0 0.0
        %387 = vmatpush1.xpose.msra.mxu0 0.0
        %388 = vmatprep.subr.mxu0 0.0
        %389 = vmatpush1.xpose.msra.mxu0 0.0
        %390 = vmatprep.subr.mxu0 0.0
        %391 = vmatpush1.xpose.msra.mxu0 0.0
        %392 = vmatprep.subr.mxu0 0.0
        %393 = vmatpush1.xpose.msra.mxu0 0.0
        %394 = vmatprep.subr.mxu0 0.0
        %395 = vmatpush1.xpose.msra.mxu0 0.0
        %396 = vmatprep.subr.mxu0 0.0
        %397 = vmatpush1.xpose.msra.mxu0 0.0
        %398 = vmatprep.subr.mxu0 0.0
        %399 = vmatpush1.xpose.msra.mxu0 0.0
        %400 = vmatprep.subr.mxu0 0.0
        %401 = vmatpush1.xpose.msra.mxu0 0.0
        %402 = vmatprep.subr.mxu0 0.0
        %403 = vmatpush1.xpose.msra.mxu0 0.0
        %404 = vmatprep.subr.mxu0 0.0
        %405 = vmatpush1.xpose.msra.mxu0 0.0
        %406 = vmatprep.subr.mxu0 0.0
        %407 = vmatpush1.xpose.msra.mxu0 0.0
        %408 = vmatprep.subr.mxu0 0.0
        %409 = vmatpush1.xpose.msra.mxu0 0.0
        %410 = vmatprep.subr.mxu0 0.0
        %411 = vmatpush1.xpose.msra.mxu0 0.0
        %412 = vmatprep.subr.mxu0 0.0
        %413 = vmatpush1.xpose.msra.mxu0 0.0
        %414 = vmatprep.subr.mxu0 0.0
        %415 = vmatpush1.xpose.msra.mxu0 0.0
        %416 = vmatprep.subr.mxu0 0.0
        %417 = vmatpush1.xpose.msra.mxu0 0.0
        %418 = vmatprep.subr.mxu0 0.0
        %419 = vmatpush1.xpose.msra.mxu0 0.0
        %420 = vmatprep.subr.mxu0 0.0
        %421 = vmatpush1.xpose.msra.mxu0 0.0
        %422 = vmatprep.subr.mxu0 0.0
        %423 = vmatpush1.xpose.msra.mxu0 0.0
        %424 = vmatprep.subr.mxu0 0.0
        %425 = vmatpush1.xpose.msra.mxu0 0.0
        %426 = vmatprep.subr.mxu0 0.0
        %427 = vmatpush1.xpose.msra.mxu0 0.0
        %428 = vmatprep.subr.mxu0 0.0
        %429 = vmatpush1.xpose.msra.mxu0 0.0
        %430 = vmatprep.subr.mxu0 0.0
        %431 = vmatpush1.xpose.msra.mxu0 0.0
        %432 = vmatprep.subr.mxu0 0.0
        %433 = vmatpush1.xpose.msra.mxu0 0.0
        %434 = vmatprep.subr.mxu0 0.0
        %435 = vmatpush1.xpose.msra.mxu0 0.0
        %436 = vmatprep.subr.mxu0 0.0
        %437 = vmatpush1.xpose.msra.mxu0 0.0
        %438 = vmatprep.mubr.f32.mxu0 %v232
        %439 = vmatmul.mubr.f32.gmra.mrb[0].mxu0 %v231
        %v440 = vpop.f32.mrb[0].mxu0
        %v441 = vadd.f32 %v371, %v440
        %v442 = vpop.f32.mrb[0].mxu0
        %443 = vdwg.mxu0
        %444 = vmatprep.subr.mxu0 %v259
        %445 = vmatpush1.xpose.msra.mxu0 %v258
        %446 = vmatprep.subr.mxu0 %v284
        %447 = vmatpush1.xpose.msra.mxu0 %v283
        %448 = vmatprep.subr.mxu0 0.0
        %449 = vmatpush1.xpose.msra.mxu0 0.0
        %450 = vmatprep.subr.mxu0 0.0
        %451 = vmatpush1.xpose.msra.mxu0 0.0
        %452 = vmatprep.subr.mxu0 0.0
        %453 = vmatpush1.xpose.msra.mxu0 0.0
        %454 = vmatprep.subr.mxu0 0.0
        %455 = vmatpush1.xpose.msra.mxu0 0.0
        %456 = vmatprep.subr.mxu0 0.0
        %457 = vmatpush1.xpose.msra.mxu0 0.0
        %458 = vmatprep.subr.mxu0 0.0
        %459 = vmatpush1.xpose.msra.mxu0 0.0
        %460 = vmatprep.subr.mxu0 0.0
        %461 = vmatpush1.xpose.msra.mxu0 0.0
        %462 = vmatprep.subr.mxu0 0.0
        %463 = vmatpush1.xpose.msra.mxu0 0.0
        %464 = vmatprep.subr.mxu0 0.0
        %465 = vmatpush1.xpose.msra.mxu0 0.0
        %466 = vmatprep.subr.mxu0 0.0
        %467 = vmatpush1.xpose.msra.mxu0 0.0
        %468 = vmatprep.subr.mxu0 0.0
        %469 = vmatpush1.xpose.msra.mxu0 0.0
        %470 = vmatprep.subr.mxu0 0.0
        %471 = vmatpush1.xpose.msra.mxu0 0.0
        %472 = vmatprep.subr.mxu0 0.0
        %473 = vmatpush1.xpose.msra.mxu0 0.0
        %474 = vmatprep.subr.mxu0 0.0
        %475 = vmatpush1.xpose.msra.mxu0 0.0
        %476 = vmatprep.subr.mxu0 0.0
        %477 = vmatpush1.xpose.msra.mxu0 0.0
        %478 = vmatprep.subr.mxu0 0.0
        %479 = vmatpush1.xpose.msra.mxu0 0.0
        %480 = vmatprep.subr.mxu0 0.0
        %481 = vmatpush1.xpose.msra.mxu0 0.0
        %482 = vmatprep.subr.mxu0 0.0
        %483 = vmatpush1.xpose.msra.mxu0 0.0
        %484 = vmatprep.subr.mxu0 0.0
        %485 = vmatpush1.xpose.msra.mxu0 0.0
        %486 = vmatprep.subr.mxu0 0.0
        %487 = vmatpush1.xpose.msra.mxu0 0.0
        %488 = vmatprep.subr.mxu0 0.0
        %489 = vmatpush1.xpose.msra.mxu0 0.0
        %490 = vmatprep.subr.mxu0 0.0
        %491 = vmatpush1.xpose.msra.mxu0 0.0
        %492 = vmatprep.subr.mxu0 0.0
        %493 = vmatpush1.xpose.msra.mxu0 0.0
        %494 = vmatprep.subr.mxu0 0.0
        %495 = vmatpush1.xpose.msra.mxu0 0.0
        %496 = vmatprep.subr.mxu0 0.0
        %497 = vmatpush1.xpose.msra.mxu0 0.0
        %498 = vmatprep.subr.mxu0 0.0
        %499 = vmatpush1.xpose.msra.mxu0 0.0
        %500 = vmatprep.subr.mxu0 0.0
        %501 = vmatpush1.xpose.msra.mxu0 0.0
        %502 = vmatprep.subr.mxu0 0.0
        %503 = vmatpush1.xpose.msra.mxu0 0.0
        %504 = vmatprep.subr.mxu0 0.0
        %505 = vmatpush1.xpose.msra.mxu0 0.0
        %506 = vmatprep.subr.mxu0 0.0
        %507 = vmatpush1.xpose.msra.mxu0 0.0
        %508 = vmatprep.mubr.f32.mxu0 %v234
        %509 = vmatmul.mubr.f32.gmra.mrb[0].mxu0 %v233
        %v510 = vpop.f32.mrb[0].mxu0
        %v511 = vadd.f32 %v441, %v510
        %v512 = vpop.f32.mrb[0].mxu0
        %513 = vdwg.mxu0
        %514 = vmatprep.subr.mxu0 %v261
        %515 = vmatpush1.xpose.msra.mxu0 %v260
        %516 = vmatprep.subr.mxu0 %v286
        %517 = vmatpush1.xpose.msra.mxu0 %v285
        %518 = vmatprep.subr.mxu0 0.0
        %519 = vmatpush1.xpose.msra.mxu0 0.0
        %520 = vmatprep.subr.mxu0 0.0
        %521 = vmatpush1.xpose.msra.mxu0 0.0
        %522 = vmatprep.subr.mxu0 0.0
        %523 = vmatpush1.xpose.msra.mxu0 0.0
        %524 = vmatprep.subr.mxu0 0.0
        %525 = vmatpush1.xpose.msra.mxu0 0.0
        %526 = vmatprep.subr.mxu0 0.0
        %527 = vmatpush1.xpose.msra.mxu0 0.0
        %528 = vmatprep.subr.mxu0 0.0
        %529 = vmatpush1.xpose.msra.mxu0 0.0
        %530 = vmatprep.subr.mxu0 0.0
        %531 = vmatpush1.xpose.msra.mxu0 0.0
        %532 = vmatprep.subr.mxu0 0.0
        %533 = vmatpush1.xpose.msra.mxu0 0.0
        %534 = vmatprep.subr.mxu0 0.0
        %535 = vmatpush1.xpose.msra.mxu0 0.0
        %536 = vmatprep.subr.mxu0 0.0
        %537 = vmatpush1.xpose.msra.mxu0 0.0
        %538 = vmatprep.subr.mxu0 0.0
        %539 = vmatpush1.xpose.msra.mxu0 0.0
        %540 = vmatprep.subr.mxu0 0.0
        %541 = vmatpush1.xpose.msra.mxu0 0.0
        %542 = vmatprep.subr.mxu0 0.0
        %543 = vmatpush1.xpose.msra.mxu0 0.0
        %544 = vmatprep.subr.mxu0 0.0
        %545 = vmatpush1.xpose.msra.mxu0 0.0
        %546 = vmatprep.subr.mxu0 0.0
        %547 = vmatpush1.xpose.msra.mxu0 0.0
        %548 = vmatprep.subr.mxu0 0.0
        %549 = vmatpush1.xpose.msra.mxu0 0.0
        %550 = vmatprep.subr.mxu0 0.0
        %551 = vmatpush1.xpose.msra.mxu0 0.0
        %552 = vmatprep.subr.mxu0 0.0
        %553 = vmatpush1.xpose.msra.mxu0 0.0
        %554 = vmatprep.subr.mxu0 0.0
        %555 = vmatpush1.xpose.msra.mxu0 0.0
        %556 = vmatprep.subr.mxu0 0.0
        %557 = vmatpush1.xpose.msra.mxu0 0.0
        %558 = vmatprep.subr.mxu0 0.0
        %559 = vmatpush1.xpose.msra.mxu0 0.0
        %560 = vmatprep.subr.mxu0 0.0
        %561 = vmatpush1.xpose.msra.mxu0 0.0
        %562 = vmatprep.subr.mxu0 0.0
        %563 = vmatpush1.xpose.msra.mxu0 0.0
        %564 = vmatprep.subr.mxu0 0.0
        %565 = vmatpush1.xpose.msra.mxu0 0.0
        %566 = vmatprep.subr.mxu0 0.0
        %567 = vmatpush1.xpose.msra.mxu0 0.0
        %568 = vmatprep.subr.mxu0 0.0
        %569 = vmatpush1.xpose.msra.mxu0 0.0
        %570 = vmatprep.subr.mxu0 0.0
        %571 = vmatpush1.xpose.msra.mxu0 0.0
        %572 = vmatprep.subr.mxu0 0.0
        %573 = vmatpush1.xpose.msra.mxu0 0.0
        %574 = vmatprep.subr.mxu0 0.0
        %575 = vmatpush1.xpose.msra.mxu0 0.0
        %576 = vmatprep.subr.mxu0 0.0
        %577 = vmatpush1.xpose.msra.mxu0 0.0
        %578 = vmatprep.mubr.f32.mxu0 %v236
        %579 = vmatmul.mubr.f32.gmra.mrb[0].mxu0 %v235
        %v580 = vpop.f32.mrb[0].mxu0
        %v581 = vadd.f32 %v511, %v580
        %v582 = vpop.f32.mrb[0].mxu0
        %583 = vdwg.mxu0
        %584 = vmatprep.subr.mxu0 %v263
        %585 = vmatpush1.xpose.msra.mxu0 %v262
        %586 = vmatprep.subr.mxu0 %v288
        %587 = vmatpush1.xpose.msra.mxu0 %v287
        %588 = vmatprep.subr.mxu0 0.0
        %589 = vmatpush1.xpose.msra.mxu0 0.0
        %590 = vmatprep.subr.mxu0 0.0
        %591 = vmatpush1.xpose.msra.mxu0 0.0
        %592 = vmatprep.subr.mxu0 0.0
        %593 = vmatpush1.xpose.msra.mxu0 0.0
        %594 = vmatprep.subr.mxu0 0.0
        %595 = vmatpush1.xpose.msra.mxu0 0.0
        %596 = vmatprep.subr.mxu0 0.0
        %597 = vmatpush1.xpose.msra.mxu0 0.0
        %598 = vmatprep.subr.mxu0 0.0
        %599 = vmatpush1.xpose.msra.mxu0 0.0
        %600 = vmatprep.subr.mxu0 0.0
        %601 = vmatpush1.xpose.msra.mxu0 0.0
        %602 = vmatprep.subr.mxu0 0.0
        %603 = vmatpush1.xpose.msra.mxu0 0.0
        %604 = vmatprep.subr.mxu0 0.0
        %605 = vmatpush1.xpose.msra.mxu0 0.0
        %606 = vmatprep.subr.mxu0 0.0
        %607 = vmatpush1.xpose.msra.mxu0 0.0
        %608 = vmatprep.subr.mxu0 0.0
        %609 = vmatpush1.xpose.msra.mxu0 0.0
        %610 = vmatprep.subr.mxu0 0.0
        %611 = vmatpush1.xpose.msra.mxu0 0.0
        %612 = vmatprep.subr.mxu0 0.0
        %613 = vmatpush1.xpose.msra.mxu0 0.0
        %614 = vmatprep.subr.mxu0 0.0
        %615 = vmatpush1.xpose.msra.mxu0 0.0
        %616 = vmatprep.subr.mxu0 0.0
        %617 = vmatpush1.xpose.msra.mxu0 0.0
        %618 = vmatprep.subr.mxu0 0.0
        %619 = vmatpush1.xpose.msra.mxu0 0.0
        %620 = vmatprep.subr.mxu0 0.0
        %621 = vmatpush1.xpose.msra.mxu0 0.0
        %622 = vmatprep.subr.mxu0 0.0
        %623 = vmatpush1.xpose.msra.mxu0 0.0
        %624 = vmatprep.subr.mxu0 0.0
        %625 = vmatpush1.xpose.msra.mxu0 0.0
        %626 = vmatprep.subr.mxu0 0.0
        %627 = vmatpush1.xpose.msra.mxu0 0.0
        %628 = vmatprep.subr.mxu0 0.0
        %629 = vmatpush1.xpose.msra.mxu0 0.0
        %630 = vmatprep.subr.mxu0 0.0
        %631 = vmatpush1.xpose.msra.mxu0 0.0
        %632 = vmatprep.subr.mxu0 0.0
        %633 = vmatpush1.xpose.msra.mxu0 0.0
        %634 = vmatprep.subr.mxu0 0.0
        %635 = vmatpush1.xpose.msra.mxu0 0.0
        %636 = vmatprep.subr.mxu0 0.0
        %637 = vmatpush1.xpose.msra.mxu0 0.0
        %638 = vmatprep.subr.mxu0 0.0
        %639 = vmatpush1.xpose.msra.mxu0 0.0
        %640 = vmatprep.subr.mxu0 0.0
        %641 = vmatpush1.xpose.msra.mxu0 0.0
        %642 = vmatprep.subr.mxu0 0.0
        %643 = vmatpush1.xpose.msra.mxu0 0.0
        %644 = vmatprep.subr.mxu0 0.0
        %645 = vmatpush1.xpose.msra.mxu0 0.0
        %646 = vmatprep.subr.mxu0 0.0
        %647 = vmatpush1.xpose.msra.mxu0 0.0
        %648 = vmatprep.mubr.f32.mxu0 %v238
        %649 = vmatmul.mubr.f32.gmra.mrb[0].mxu0 %v237
        %v650 = vpop.f32.mrb[0].mxu0
        %v651 = vadd.f32 %v581, %v650
        %v652 = vpop.f32.mrb[0].mxu0
        %653 = vdwg.mxu0
        %654 = vmatprep.subr.mxu0 %v265
        %655 = vmatpush1.xpose.msra.mxu0 %v264
        %656 = vmatprep.subr.mxu0 %v290
        %657 = vmatpush1.xpose.msra.mxu0 %v289
        %658 = vmatprep.subr.mxu0 0.0
        %659 = vmatpush1.xpose.msra.mxu0 0.0
        %660 = vmatprep.subr.mxu0 0.0
        %661 = vmatpush1.xpose.msra.mxu0 0.0
        %662 = vmatprep.subr.mxu0 0.0
        %663 = vmatpush1.xpose.msra.mxu0 0.0
        %664 = vmatprep.subr.mxu0 0.0
        %665 = vmatpush1.xpose.msra.mxu0 0.0
        %666 = vmatprep.subr.mxu0 0.0
        %667 = vmatpush1.xpose.msra.mxu0 0.0
        %668 = vmatprep.subr.mxu0 0.0
        %669 = vmatpush1.xpose.msra.mxu0 0.0
        %670 = vmatprep.subr.mxu0 0.0
        %671 = vmatpush1.xpose.msra.mxu0 0.0
        %672 = vmatprep.subr.mxu0 0.0
        %673 = vmatpush1.xpose.msra.mxu0 0.0
        %674 = vmatprep.subr.mxu0 0.0
        %675 = vmatpush1.xpose.msra.mxu0 0.0
        %676 = vmatprep.subr.mxu0 0.0
        %677 = vmatpush1.xpose.msra.mxu0 0.0
        %678 = vmatprep.subr.mxu0 0.0
        %679 = vmatpush1.xpose.msra.mxu0 0.0
        %680 = vmatprep.subr.mxu0 0.0
        %681 = vmatpush1.xpose.msra.mxu0 0.0
        %682 = vmatprep.subr.mxu0 0.0
        %683 = vmatpush1.xpose.msra.mxu0 0.0
        %684 = vmatprep.subr.mxu0 0.0
        %685 = vmatpush1.xpose.msra.mxu0 0.0
        %686 = vmatprep.subr.mxu0 0.0
        %687 = vmatpush1.xpose.msra.mxu0 0.0
        %688 = vmatprep.subr.mxu0 0.0
        %689 = vmatpush1.xpose.msra.mxu0 0.0
        %690 = vmatprep.subr.mxu0 0.0
        %691 = vmatpush1.xpose.msra.mxu0 0.0
        %692 = vmatprep.subr.mxu0 0.0
        %693 = vmatpush1.xpose.msra.mxu0 0.0
        %694 = vmatprep.subr.mxu0 0.0
        %695 = vmatpush1.xpose.msra.mxu0 0.0
        %696 = vmatprep.subr.mxu0 0.0
        %697 = vmatpush1.xpose.msra.mxu0 0.0
        %698 = vmatprep.subr.mxu0 0.0
        %699 = vmatpush1.xpose.msra.mxu0 0.0
        %700 = vmatprep.subr.mxu0 0.0
        %701 = vmatpush1.xpose.msra.mxu0 0.0
        %702 = vmatprep.subr.mxu0 0.0
        %703 = vmatpush1.xpose.msra.mxu0 0.0
        %704 = vmatprep.subr.mxu0 0.0
        %705 = vmatpush1.xpose.msra.mxu0 0.0
        %706 = vmatprep.subr.mxu0 0.0
        %707 = vmatpush1.xpose.msra.mxu0 0.0
        %708 = vmatprep.subr.mxu0 0.0
        %709 = vmatpush1.xpose.msra.mxu0 0.0
        %710 = vmatprep.subr.mxu0 0.0
        %711 = vmatpush1.xpose.msra.mxu0 0.0
        %712 = vmatprep.subr.mxu0 0.0
        %713 = vmatpush1.xpose.msra.mxu0 0.0
        %714 = vmatprep.subr.mxu0 0.0
        %715 = vmatpush1.xpose.msra.mxu0 0.0
        %716 = vmatprep.subr.mxu0 0.0
        %717 = vmatpush1.xpose.msra.mxu0 0.0
        %718 = vmatprep.mubr.f32.mxu0 %v240
        %719 = vmatmul.mubr.f32.gmra.mrb[0].mxu0 %v239
        %v720 = vpop.f32.mrb[0].mxu0
        %v721 = vadd.f32 %v651, %v720
        %v722 = vpop.f32.mrb[0].mxu0
        %723 = vdwg.mxu0
        %724 = vmatprep.subr.mxu0 %v267
        %725 = vmatpush1.xpose.msra.mxu0 %v266
        %726 = vmatprep.subr.mxu0 %v292
        %727 = vmatpush1.xpose.msra.mxu0 %v291
        %728 = vmatprep.subr.mxu0 0.0
        %729 = vmatpush1.xpose.msra.mxu0 0.0
        %730 = vmatprep.subr.mxu0 0.0
        %731 = vmatpush1.xpose.msra.mxu0 0.0
        %732 = vmatprep.subr.mxu0 0.0
        %733 = vmatpush1.xpose.msra.mxu0 0.0
        %734 = vmatprep.subr.mxu0 0.0
        %735 = vmatpush1.xpose.msra.mxu0 0.0
        %736 = vmatprep.subr.mxu0 0.0
        %737 = vmatpush1.xpose.msra.mxu0 0.0
        %738 = vmatprep.subr.mxu0 0.0
        %739 = vmatpush1.xpose.msra.mxu0 0.0
        %740 = vmatprep.subr.mxu0 0.0
        %741 = vmatpush1.xpose.msra.mxu0 0.0
        %742 = vmatprep.subr.mxu0 0.0
        %743 = vmatpush1.xpose.msra.mxu0 0.0
        %744 = vmatprep.subr.mxu0 0.0
        %745 = vmatpush1.xpose.msra.mxu0 0.0
        %746 = vmatprep.subr.mxu0 0.0
        %747 = vmatpush1.xpose.msra.mxu0 0.0
        %748 = vmatprep.subr.mxu0 0.0
        %749 = vmatpush1.xpose.msra.mxu0 0.0
        %750 = vmatprep.subr.mxu0 0.0
        %751 = vmatpush1.xpose.msra.mxu0 0.0
        %752 = vmatprep.subr.mxu0 0.0
        %753 = vmatpush1.xpose.msra.mxu0 0.0
        %754 = vmatprep.subr.mxu0 0.0
        %755 = vmatpush1.xpose.msra.mxu0 0.0
        %756 = vmatprep.subr.mxu0 0.0
        %757 = vmatpush1.xpose.msra.mxu0 0.0
        %758 = vmatprep.subr.mxu0 0.0
        %759 = vmatpush1.xpose.msra.mxu0 0.0
        %760 = vmatprep.subr.mxu0 0.0
        %761 = vmatpush1.xpose.msra.mxu0 0.0
        %762 = vmatprep.subr.mxu0 0.0
        %763 = vmatpush1.xpose.msra.mxu0 0.0
        %764 = vmatprep.subr.mxu0 0.0
        %765 = vmatpush1.xpose.msra.mxu0 0.0
        %766 = vmatprep.subr.mxu0 0.0
        %767 = vmatpush1.xpose.msra.mxu0 0.0
        %768 = vmatprep.subr.mxu0 0.0
        %769 = vmatpush1.xpose.msra.mxu0 0.0
        %770 = vmatprep.subr.mxu0 0.0
        %771 = vmatpush1.xpose.msra.mxu0 0.0
        %772 = vmatprep.subr.mxu0 0.0
        %773 = vmatpush1.xpose.msra.mxu0 0.0
        %774 = vmatprep.subr.mxu0 0.0
        %775 = vmatpush1.xpose.msra.mxu0 0.0
        %776 = vmatprep.subr.mxu0 0.0
        %777 = vmatpush1.xpose.msra.mxu0 0.0
        %778 = vmatprep.subr.mxu0 0.0
        %779 = vmatpush1.xpose.msra.mxu0 0.0
        %780 = vmatprep.subr.mxu0 0.0
        %781 = vmatpush1.xpose.msra.mxu0 0.0
        %782 = vmatprep.subr.mxu0 0.0
        %783 = vmatpush1.xpose.msra.mxu0 0.0
        %784 = vmatprep.subr.mxu0 0.0
        %785 = vmatpush1.xpose.msra.mxu0 0.0
        %786 = vmatprep.subr.mxu0 0.0
        %787 = vmatpush1.xpose.msra.mxu0 0.0
        %788 = vmatprep.mubr.f32.mxu0 %v242
        %789 = vmatmul.mubr.f32.gmra.mrb[0].mxu0 %v241
        %v790 = vpop.f32.mrb[0].mxu0
        %v791 = vadd.f32 %v721, %v790
        %v792 = vpop.f32.mrb[0].mxu0
        %793 = vdwg.mxu0
        %794 = vmatprep.subr.mxu0 %v269
        %795 = vmatpush1.xpose.msra.mxu0 %v268
        %796 = vmatprep.subr.mxu0 %v294
        %797 = vmatpush1.xpose.msra.mxu0 %v293
        %798 = vmatprep.subr.mxu0 0.0
        %799 = vmatpush1.xpose.msra.mxu0 0.0
        %800 = vmatprep.subr.mxu0 0.0
        %801 = vmatpush1.xpose.msra.mxu0 0.0
        %802 = vmatprep.subr.mxu0 0.0
        %803 = vmatpush1.xpose.msra.mxu0 0.0
        %804 = vmatprep.subr.mxu0 0.0
        %805 = vmatpush1.xpose.msra.mxu0 0.0
        %806 = vmatprep.subr.mxu0 0.0
        %807 = vmatpush1.xpose.msra.mxu0 0.0
        %808 = vmatprep.subr.mxu0 0.0
        %809 = vmatpush1.xpose.msra.mxu0 0.0
        %810 = vmatprep.subr.mxu0 0.0
        %811 = vmatpush1.xpose.msra.mxu0 0.0
        %812 = vmatprep.subr.mxu0 0.0
        %813 = vmatpush1.xpose.msra.mxu0 0.0
        %814 = vmatprep.subr.mxu0 0.0
        %815 = vmatpush1.xpose.msra.mxu0 0.0
        %816 = vmatprep.subr.mxu0 0.0
        %817 = vmatpush1.xpose.msra.mxu0 0.0
        %818 = vmatprep.subr.mxu0 0.0
        %819 = vmatpush1.xpose.msra.mxu0 0.0
        %820 = vmatprep.subr.mxu0 0.0
        %821 = vmatpush1.xpose.msra.mxu0 0.0
        %822 = vmatprep.subr.mxu0 0.0
        %823 = vmatpush1.xpose.msra.mxu0 0.0
        %824 = vmatprep.subr.mxu0 0.0
        %825 = vmatpush1.xpose.msra.mxu0 0.0
        %826 = vmatprep.subr.mxu0 0.0
        %827 = vmatpush1.xpose.msra.mxu0 0.0
        %828 = vmatprep.subr.mxu0 0.0
        %829 = vmatpush1.xpose.msra.mxu0 0.0
        %830 = vmatprep.subr.mxu0 0.0
        %831 = vmatpush1.xpose.msra.mxu0 0.0
        %832 = vmatprep.subr.mxu0 0.0
        %833 = vmatpush1.xpose.msra.mxu0 0.0
        %834 = vmatprep.subr.mxu0 0.0
        %835 = vmatpush1.xpose.msra.mxu0 0.0
        %836 = vmatprep.subr.mxu0 0.0
        %837 = vmatpush1.xpose.msra.mxu0 0.0
        %838 = vmatprep.subr.mxu0 0.0
        %839 = vmatpush1.xpose.msra.mxu0 0.0
        %840 = vmatprep.subr.mxu0 0.0
        %841 = vmatpush1.xpose.msra.mxu0 0.0
        %842 = vmatprep.subr.mxu0 0.0
        %843 = vmatpush1.xpose.msra.mxu0 0.0
        %844 = vmatprep.subr.mxu0 0.0
        %845 = vmatpush1.xpose.msra.mxu0 0.0
        %846 = vmatprep.subr.mxu0 0.0
        %847 = vmatpush1.xpose.msra.mxu0 0.0
        %848 = vmatprep.subr.mxu0 0.0
        %849 = vmatpush1.xpose.msra.mxu0 0.0
        %850 = vmatprep.subr.mxu0 0.0
        %851 = vmatpush1.xpose.msra.mxu0 0.0
        %852 = vmatprep.subr.mxu0 0.0
        %853 = vmatpush1.xpose.msra.mxu0 0.0
        %854 = vmatprep.subr.mxu0 0.0
        %855 = vmatpush1.xpose.msra.mxu0 0.0
        %856 = vmatprep.subr.mxu0 0.0
        %857 = vmatpush1.xpose.msra.mxu0 0.0
        %858 = vmatprep.mubr.f32.mxu0 %v244
        %859 = vmatmul.mubr.f32.gmra.mrb[0].mxu0 %v243
        %v860 = vpop.f32.mrb[0].mxu0
        %v861 = vadd.f32 %v791, %v860
        %v862 = vpop.f32.mrb[0].mxu0
        %863 = vdwg.mxu0
        %864 = vmatprep.subr.mxu0 %v271
        %865 = vmatpush1.xpose.msra.mxu0 %v270
        %866 = vmatprep.subr.mxu0 %v296
        %867 = vmatpush1.xpose.msra.mxu0 %v295
        %868 = vmatprep.subr.mxu0 0.0
        %869 = vmatpush1.xpose.msra.mxu0 0.0
        %870 = vmatprep.subr.mxu0 0.0
        %871 = vmatpush1.xpose.msra.mxu0 0.0
        %872 = vmatprep.subr.mxu0 0.0
        %873 = vmatpush1.xpose.msra.mxu0 0.0
        %874 = vmatprep.subr.mxu0 0.0
        %875 = vmatpush1.xpose.msra.mxu0 0.0
        %876 = vmatprep.subr.mxu0 0.0
        %877 = vmatpush1.xpose.msra.mxu0 0.0
        %878 = vmatprep.subr.mxu0 0.0
        %879 = vmatpush1.xpose.msra.mxu0 0.0
        %880 = vmatprep.subr.mxu0 0.0
        %881 = vmatpush1.xpose.msra.mxu0 0.0
        %882 = vmatprep.subr.mxu0 0.0
        %883 = vmatpush1.xpose.msra.mxu0 0.0
        %884 = vmatprep.subr.mxu0 0.0
        %885 = vmatpush1.xpose.msra.mxu0 0.0
        %886 = vmatprep.subr.mxu0 0.0
        %887 = vmatpush1.xpose.msra.mxu0 0.0
        %888 = vmatprep.subr.mxu0 0.0
        %889 = vmatpush1.xpose.msra.mxu0 0.0
        %890 = vmatprep.subr.mxu0 0.0
        %891 = vmatpush1.xpose.msra.mxu0 0.0
        %892 = vmatprep.subr.mxu0 0.0
        %893 = vmatpush1.xpose.msra.mxu0 0.0
        %894 = vmatprep.subr.mxu0 0.0
        %895 = vmatpush1.xpose.msra.mxu0 0.0
        %896 = vmatprep.subr.mxu0 0.0
        %897 = vmatpush1.xpose.msra.mxu0 0.0
        %898 = vmatprep.subr.mxu0 0.0
        %899 = vmatpush1.xpose.msra.mxu0 0.0
        %900 = vmatprep.subr.mxu0 0.0
        %901 = vmatpush1.xpose.msra.mxu0 0.0
        %902 = vmatprep.subr.mxu0 0.0
        %903 = vmatpush1.xpose.msra.mxu0 0.0
        %904 = vmatprep.subr.mxu0 0.0
        %905 = vmatpush1.xpose.msra.mxu0 0.0
        %906 = vmatprep.subr.mxu0 0.0
        %907 = vmatpush1.xpose.msra.mxu0 0.0
        %908 = vmatprep.subr.mxu0 0.0
        %909 = vmatpush1.xpose.msra.mxu0 0.0
        %910 = vmatprep.subr.mxu0 0.0
        %911 = vmatpush1.xpose.msra.mxu0 0.0
        %912 = vmatprep.subr.mxu0 0.0
        %913 = vmatpush1.xpose.msra.mxu0 0.0
        %914 = vmatprep.subr.mxu0 0.0
        %915 = vmatpush1.xpose.msra.mxu0 0.0
        %916 = vmatprep.subr.mxu0 0.0
        %917 = vmatpush1.xpose.msra.mxu0 0.0
        %918 = vmatprep.subr.mxu0 0.0
        %919 = vmatpush1.xpose.msra.mxu0 0.0
        %920 = vmatprep.subr.mxu0 0.0
        %921 = vmatpush1.xpose.msra.mxu0 0.0
        %922 = vmatprep.subr.mxu0 0.0
        %923 = vmatpush1.xpose.msra.mxu0 0.0
        %924 = vmatprep.subr.mxu0 0.0
        %925 = vmatpush1.xpose.msra.mxu0 0.0
        %926 = vmatprep.subr.mxu0 0.0
        %927 = vmatpush1.xpose.msra.mxu0 0.0
        %928 = vmatprep.mubr.f32.mxu0 %v246
        %929 = vmatmul.mubr.f32.gmra.mrb[0].mxu0 %v245
        %v930 = vpop.f32.mrb[0].mxu0
        %v931 = vadd.f32 %v861, %v930
        %v932 = vpop.f32.mrb[0].mxu0
        %933 = vdwg.mxu0
        %934 = vmatprep.subr.mxu0 %v273
        %935 = vmatpush1.xpose.msra.mxu0 %v272
        %936 = vmatprep.subr.mxu0 %v298
        %937 = vmatpush1.xpose.msra.mxu0 %v297
        %938 = vmatprep.subr.mxu0 0.0
        %939 = vmatpush1.xpose.msra.mxu0 0.0
        %940 = vmatprep.subr.mxu0 0.0
        %941 = vmatpush1.xpose.msra.mxu0 0.0
        %942 = vmatprep.subr.mxu0 0.0
        %943 = vmatpush1.xpose.msra.mxu0 0.0
        %944 = vmatprep.subr.mxu0 0.0
        %945 = vmatpush1.xpose.msra.mxu0 0.0
        %946 = vmatprep.subr.mxu0 0.0
        %947 = vmatpush1.xpose.msra.mxu0 0.0
        %948 = vmatprep.subr.mxu0 0.0
        %949 = vmatpush1.xpose.msra.mxu0 0.0
        %950 = vmatprep.subr.mxu0 0.0
        %951 = vmatpush1.xpose.msra.mxu0 0.0
        %952 = vmatprep.subr.mxu0 0.0
        %953 = vmatpush1.xpose.msra.mxu0 0.0
        %954 = vmatprep.subr.mxu0 0.0
        %955 = vmatpush1.xpose.msra.mxu0 0.0
        %956 = vmatprep.subr.mxu0 0.0
        %957 = vmatpush1.xpose.msra.mxu0 0.0
        %958 = vmatprep.subr.mxu0 0.0
        %959 = vmatpush1.xpose.msra.mxu0 0.0
        %960 = vmatprep.subr.mxu0 0.0
        %961 = vmatpush1.xpose.msra.mxu0 0.0
        %962 = vmatprep.subr.mxu0 0.0
        %963 = vmatpush1.xpose.msra.mxu0 0.0
        %964 = vmatprep.subr.mxu0 0.0
        %965 = vmatpush1.xpose.msra.mxu0 0.0
        %966 = vmatprep.subr.mxu0 0.0
        %967 = vmatpush1.xpose.msra.mxu0 0.0
        %968 = vmatprep.subr.mxu0 0.0
        %969 = vmatpush1.xpose.msra.mxu0 0.0
        %970 = vmatprep.subr.mxu0 0.0
        %971 = vmatpush1.xpose.msra.mxu0 0.0
        %972 = vmatprep.subr.mxu0 0.0
        %973 = vmatpush1.xpose.msra.mxu0 0.0
        %974 = vmatprep.subr.mxu0 0.0
        %975 = vmatpush1.xpose.msra.mxu0 0.0
        %976 = vmatprep.subr.mxu0 0.0
        %977 = vmatpush1.xpose.msra.mxu0 0.0
        %978 = vmatprep.subr.mxu0 0.0
        %979 = vmatpush1.xpose.msra.mxu0 0.0
        %980 = vmatprep.subr.mxu0 0.0
        %981 = vmatpush1.xpose.msra.mxu0 0.0
        %982 = vmatprep.subr.mxu0 0.0
        %983 = vmatpush1.xpose.msra.mxu0 0.0
        %984 = vmatprep.subr.mxu0 0.0
        %985 = vmatpush1.xpose.msra.mxu0 0.0
        %986 = vmatprep.subr.mxu0 0.0
        %987 = vmatpush1.xpose.msra.mxu0 0.0
        %988 = vmatprep.subr.mxu0 0.0
        %989 = vmatpush1.xpose.msra.mxu0 0.0
        %990 = vmatprep.subr.mxu0 0.0
        %991 = vmatpush1.xpose.msra.mxu0 0.0
        %992 = vmatprep.subr.mxu0 0.0
        %993 = vmatpush1.xpose.msra.mxu0 0.0
        %994 = vmatprep.subr.mxu0 0.0
        %995 = vmatpush1.xpose.msra.mxu0 0.0
        %996 = vmatprep.subr.mxu0 0.0
        %997 = vmatpush1.xpose.msra.mxu0 0.0
        %998 = vmatprep.mubr.f32.mxu0 %v248
        %999 = vmatmul.mubr.f32.gmra.mrb[0].mxu0 %v247
        %v1000 = vpop.f32.mrb[0].mxu0
        %v1001 = vadd.f32 %v931, %v1000
        %v1002 = vpop.f32.mrb[0].mxu0
        %1003 = vdwg.mxu0
        %1004 = vmatprep.subr.mxu0 %v275
        %1005 = vmatpush1.xpose.msra.mxu0 %v274
        %1006 = vmatprep.subr.mxu0 %v300
        %1007 = vmatpush1.xpose.msra.mxu0 %v299
        %1008 = vmatprep.subr.mxu0 0.0
        %1009 = vmatpush1.xpose.msra.mxu0 0.0
        %1010 = vmatprep.subr.mxu0 0.0
        %1011 = vmatpush1.xpose.msra.mxu0 0.0
        %1012 = vmatprep.subr.mxu0 0.0
        %1013 = vmatpush1.xpose.msra.mxu0 0.0
        %1014 = vmatprep.subr.mxu0 0.0
        %1015 = vmatpush1.xpose.msra.mxu0 0.0
        %1016 = vmatprep.subr.mxu0 0.0
        %1017 = vmatpush1.xpose.msra.mxu0 0.0
        %1018 = vmatprep.subr.mxu0 0.0
        %1019 = vmatpush1.xpose.msra.mxu0 0.0
        %1020 = vmatprep.subr.mxu0 0.0
        %1021 = vmatpush1.xpose.msra.mxu0 0.0
        %1022 = vmatprep.subr.mxu0 0.0
        %1023 = vmatpush1.xpose.msra.mxu0 0.0
        %1024 = vmatprep.subr.mxu0 0.0
        %1025 = vmatpush1.xpose.msra.mxu0 0.0
        %1026 = vmatprep.subr.mxu0 0.0
        %1027 = vmatpush1.xpose.msra.mxu0 0.0
        %1028 = vmatprep.subr.mxu0 0.0
        %1029 = vmatpush1.xpose.msra.mxu0 0.0
        %1030 = vmatprep.subr.mxu0 0.0
        %1031 = vmatpush1.xpose.msra.mxu0 0.0
        %1032 = vmatprep.subr.mxu0 0.0
        %1033 = vmatpush1.xpose.msra.mxu0 0.0
        %1034 = vmatprep.subr.mxu0 0.0
        %1035 = vmatpush1.xpose.msra.mxu0 0.0
        %1036 = vmatprep.subr.mxu0 0.0
        %1037 = vmatpush1.xpose.msra.mxu0 0.0
        %1038 = vmatprep.subr.mxu0 0.0
        %1039 = vmatpush1.xpose.msra.mxu0 0.0
        %1040 = vmatprep.subr.mxu0 0.0
        %1041 = vmatpush1.xpose.msra.mxu0 0.0
        %1042 = vmatprep.subr.mxu0 0.0
        %1043 = vmatpush1.xpose.msra.mxu0 0.0
        %1044 = vmatprep.subr.mxu0 0.0
        %1045 = vmatpush1.xpose.msra.mxu0 0.0
        %1046 = vmatprep.subr.mxu0 0.0
        %1047 = vmatpush1.xpose.msra.mxu0 0.0
        %1048 = vmatprep.subr.mxu0 0.0
        %1049 = vmatpush1.xpose.msra.mxu0 0.0
        %1050 = vmatprep.subr.mxu0 0.0
        %1051 = vmatpush1.xpose.msra.mxu0 0.0
        %1052 = vmatprep.subr.mxu0 0.0
        %1053 = vmatpush1.xpose.msra.mxu0 0.0
        %1054 = vmatprep.subr.mxu0 0.0
        %1055 = vmatpush1.xpose.msra.mxu0 0.0
        %1056 = vmatprep.subr.mxu0 0.0
        %1057 = vmatpush1.xpose.msra.mxu0 0.0
        %1058 = vmatprep.subr.mxu0 0.0
        %1059 = vmatpush1.xpose.msra.mxu0 0.0
        %1060 = vmatprep.subr.mxu0 0.0
        %1061 = vmatpush1.xpose.msra.mxu0 0.0
        %1062 = vmatprep.subr.mxu0 0.0
        %1063 = vmatpush1.xpose.msra.mxu0 0.0
        %1064 = vmatprep.subr.mxu0 0.0
        %1065 = vmatpush1.xpose.msra.mxu0 0.0
        %1066 = vmatprep.subr.mxu0 0.0
        %1067 = vmatpush1.xpose.msra.mxu0 0.0
        %1068 = vmatprep.mubr.f32.mxu0 %v250
        %1069 = vmatmul.mubr.f32.gmra.mrb[0].mxu0 %v249
        %v1070 = vpop.f32.mrb[0].mxu0
        %v1071 = vadd.f32 %v1001, %v1070
        %v1072 = vpop.f32.mrb[0].mxu0
        %1073 = vdwg.mxu0
        %1074 = vmatprep.subr.mxu0 %v277
        %1075 = vmatpush1.xpose.msra.mxu0 %v276
        %1076 = vmatprep.subr.mxu0 %v302
        %1077 = vmatpush1.xpose.msra.mxu0 %v301
        %1078 = vmatprep.subr.mxu0 0.0
        %1079 = vmatpush1.xpose.msra.mxu0 0.0
        %1080 = vmatprep.subr.mxu0 0.0
        %1081 = vmatpush1.xpose.msra.mxu0 0.0
        %1082 = vmatprep.subr.mxu0 0.0
        %1083 = vmatpush1.xpose.msra.mxu0 0.0
        %1084 = vmatprep.subr.mxu0 0.0
        %1085 = vmatpush1.xpose.msra.mxu0 0.0
        %1086 = vmatprep.subr.mxu0 0.0
        %1087 = vmatpush1.xpose.msra.mxu0 0.0
        %1088 = vmatprep.subr.mxu0 0.0
        %1089 = vmatpush1.xpose.msra.mxu0 0.0
        %1090 = vmatprep.subr.mxu0 0.0
        %1091 = vmatpush1.xpose.msra.mxu0 0.0
        %1092 = vmatprep.subr.mxu0 0.0
        %1093 = vmatpush1.xpose.msra.mxu0 0.0
        %1094 = vmatprep.subr.mxu0 0.0
        %1095 = vmatpush1.xpose.msra.mxu0 0.0
        %1096 = vmatprep.subr.mxu0 0.0
        %1097 = vmatpush1.xpose.msra.mxu0 0.0
        %1098 = vmatprep.subr.mxu0 0.0
        %1099 = vmatpush1.xpose.msra.mxu0 0.0
        %1100 = vmatprep.subr.mxu0 0.0
        %1101 = vmatpush1.xpose.msra.mxu0 0.0
        %1102 = vmatprep.subr.mxu0 0.0
        %1103 = vmatpush1.xpose.msra.mxu0 0.0
        %1104 = vmatprep.subr.mxu0 0.0
        %1105 = vmatpush1.xpose.msra.mxu0 0.0
        %1106 = vmatprep.subr.mxu0 0.0
        %1107 = vmatpush1.xpose.msra.mxu0 0.0
        %1108 = vmatprep.subr.mxu0 0.0
        %1109 = vmatpush1.xpose.msra.mxu0 0.0
        %1110 = vmatprep.subr.mxu0 0.0
        %1111 = vmatpush1.xpose.msra.mxu0 0.0
        %1112 = vmatprep.subr.mxu0 0.0
        %1113 = vmatpush1.xpose.msra.mxu0 0.0
        %1114 = vmatprep.subr.mxu0 0.0
        %1115 = vmatpush1.xpose.msra.mxu0 0.0
        %1116 = vmatprep.subr.mxu0 0.0
        %1117 = vmatpush1.xpose.msra.mxu0 0.0
        %1118 = vmatprep.subr.mxu0 0.0
        %1119 = vmatpush1.xpose.msra.mxu0 0.0
        %1120 = vmatprep.subr.mxu0 0.0
        %1121 = vmatpush1.xpose.msra.mxu0 0.0
        %1122 = vmatprep.subr.mxu0 0.0
        %1123 = vmatpush1.xpose.msra.mxu0 0.0
        %1124 = vmatprep.subr.mxu0 0.0
        %1125 = vmatpush1.xpose.msra.mxu0 0.0
        %1126 = vmatprep.subr.mxu0 0.0
        %1127 = vmatpush1.xpose.msra.mxu0 0.0
        %1128 = vmatprep.subr.mxu0 0.0
        %1129 = vmatpush1.xpose.msra.mxu0 0.0
        %1130 = vmatprep.subr.mxu0 0.0
        %1131 = vmatpush1.xpose.msra.mxu0 0.0
        %1132 = vmatprep.subr.mxu0 0.0
        %1133 = vmatpush1.xpose.msra.mxu0 0.0
        %1134 = vmatprep.subr.mxu0 0.0
        %1135 = vmatpush1.xpose.msra.mxu0 0.0
        %1136 = vmatprep.subr.mxu0 0.0
        %1137 = vmatpush1.xpose.msra.mxu0 0.0
        %1138 = vmatprep.mubr.f32.mxu0 %v252
        %1139 = vmatmul.mubr.f32.gmra.mrb[0].mxu0 %v251
        %v1140 = vpop.f32.mrb[0].mxu0
        %v1141 = vadd.f32 %v1071, %v1140
        %v1142 = vpop.f32.mrb[0].mxu0
        %1143 = vdwg.mxu0
        %1144 = vmatprep.subr.mxu0 0.0
        %1145 = vmatpush1.xpose.msra.mxu0 %v278
        %1146 = vmatprep.subr.mxu0 0.0
        %1147 = vmatpush1.xpose.msra.mxu0 %v303
        %1148 = vmatprep.subr.mxu0 0.0
        %1149 = vmatpush1.xpose.msra.mxu0 0.0
        %1150 = vmatprep.subr.mxu0 0.0
        %1151 = vmatpush1.xpose.msra.mxu0 0.0
        %1152 = vmatprep.subr.mxu0 0.0
        %1153 = vmatpush1.xpose.msra.mxu0 0.0
        %1154 = vmatprep.subr.mxu0 0.0
        %1155 = vmatpush1.xpose.msra.mxu0 0.0
        %1156 = vmatprep.subr.mxu0 0.0
        %1157 = vmatpush1.xpose.msra.mxu0 0.0
        %1158 = vmatprep.subr.mxu0 0.0
        %1159 = vmatpush1.xpose.msra.mxu0 0.0
        %1160 = vmatprep.subr.mxu0 0.0
        %1161 = vmatpush1.xpose.msra.mxu0 0.0
        %1162 = vmatprep.subr.mxu0 0.0
        %1163 = vmatpush1.xpose.msra.mxu0 0.0
        %1164 = vmatprep.subr.mxu0 0.0
        %1165 = vmatpush1.xpose.msra.mxu0 0.0
        %1166 = vmatprep.subr.mxu0 0.0
        %1167 = vmatpush1.xpose.msra.mxu0 0.0
        %1168 = vmatprep.subr.mxu0 0.0
        %1169 = vmatpush1.xpose.msra.mxu0 0.0
        %1170 = vmatprep.subr.mxu0 0.0
        %1171 = vmatpush1.xpose.msra.mxu0 0.0
        %1172 = vmatprep.subr.mxu0 0.0
        %1173 = vmatpush1.xpose.msra.mxu0 0.0
        %1174 = vmatprep.subr.mxu0 0.0
        %1175 = vmatpush1.xpose.msra.mxu0 0.0
        %1176 = vmatprep.subr.mxu0 0.0
        %1177 = vmatpush1.xpose.msra.mxu0 0.0
        %1178 = vmatprep.subr.mxu0 0.0
        %1179 = vmatpush1.xpose.msra.mxu0 0.0
        %1180 = vmatprep.subr.mxu0 0.0
        %1181 = vmatpush1.xpose.msra.mxu0 0.0
        %1182 = vmatprep.subr.mxu0 0.0
        %1183 = vmatpush1.xpose.msra.mxu0 0.0
        %1184 = vmatprep.subr.mxu0 0.0
        %1185 = vmatpush1.xpose.msra.mxu0 0.0
        %1186 = vmatprep.subr.mxu0 0.0
        %1187 = vmatpush1.xpose.msra.mxu0 0.0
        %1188 = vmatprep.subr.mxu0 0.0
        %1189 = vmatpush1.xpose.msra.mxu0 0.0
        %1190 = vmatprep.subr.mxu0 0.0
        %1191 = vmatpush1.xpose.msra.mxu0 0.0
        %1192 = vmatprep.subr.mxu0 0.0
        %1193 = vmatpush1.xpose.msra.mxu0 0.0
        %1194 = vmatprep.subr.mxu0 0.0
        %1195 = vmatpush1.xpose.msra.mxu0 0.0
        %1196 = vmatprep.subr.mxu0 0.0
        %1197 = vmatpush1.xpose.msra.mxu0 0.0
        %1198 = vmatprep.subr.mxu0 0.0
        %1199 = vmatpush1.xpose.msra.mxu0 0.0
        %1200 = vmatprep.subr.mxu0 0.0
        %1201 = vmatpush1.xpose.msra.mxu0 0.0
        %1202 = vmatprep.subr.mxu0 0.0
        %1203 = vmatpush1.xpose.msra.mxu0 0.0
        %1204 = vmatprep.subr.mxu0 0.0
        %1205 = vmatpush1.xpose.msra.mxu0 0.0
        %1206 = vmatprep.subr.mxu0 0.0
        %1207 = vmatpush1.xpose.msra.mxu0 0.0
        %1208 = vmatprep.mubr.f32.mxu0 0.0
        %1209 = vmatmul.mubr.f32.gmra.mrb[0].mxu0 %v253
        %v1210 = vpop.f32.mrb[0].mxu0
        %v1211 = vadd.f32 %v1141, %v1210
        %v1212 = vpop.f32.mrb[0].mxu0
        %1213 = vdwg.mxu0
        %v1214 = vadd.f32 %v228, %v1211
        %vm1215 = vcmask 130048
        %1216 = vst.msk [vmem:[%s217] sm:$0xff] %vm1215, %v1214
        %s1217 = sand.u32 %s98, 1
        %s1218 = scalar_lea.sflag [#allocation4], %s1217
        %s1219 = sand.u32 %s98, 1
        %s1220 = smul.addr %s1219, 8
        %s1221 = scalar_lea.vmem [#allocation7], %s1220
        // Predicated region
        $region41: #{tpu_custom_call.1} parent=27 // pred_check
          %p1222 = pneg %p108
        $region42: #{tpu_custom_call.1} parent=27 // pred_check_branch
          %1224 = sbr.rel (%p1222) target = $region44
        $region43: #{tpu_custom_call.1} parent=27 // pred_region
          %s1226 = ssub.s32 128, 128
          %1227 = vsyncadd %s1218, %s1226
          %s1228 = smul.addr %s26, 128
          %s1229 = scalar_lea.hbm %s2, %s1228
          %s1231 = sshll.u32 %s1221, 4
          %s1232 = int_to_ptr.vmem [resolvable:$true] %s1231
          %1234 = dma.vmem_to_hbm [thread:$0]  %s1232, 128, %s1229, %s1218
        $region44: #{tpu_custom_call.1} parent=27 // pred_fallthru
          _
      $region28: #{tpu_custom_call.1} parent=5 // pred_fallthru
        _
      %p1235 = scmp.le.s32.totalorder 2, %s17
      // Predicated region
      $region45: #{tpu_custom_call.1} parent=5 // pred_check
        %p1236 = pneg %p1235
      $region46: #{tpu_custom_call.1} parent=5 // pred_check_branch
        %1238 = sbr.rel (%p1236) target = $region48
      $region47: #{tpu_custom_call.1} parent=5 // pred_region
        %s1239 = ssub.s32 %s17, 2
        // Predicated region
        $region49: #{tpu_custom_call.1} parent=47 // pred_check
          %p1240 = pneg %p114
        $region50: #{tpu_custom_call.1} parent=47 // pred_check_branch
          %1242 = sbr.rel (%p1240) target = $region52
        $region51: #{tpu_custom_call.1} parent=47 // pred_region
          %s1243 = sand.u32 %s99, 1
          %s1244 = scalar_lea.sflag [#allocation4], %s1243
          %s1245 = sand.u32 %s99, 1
          %s1246 = smul.addr %s1245, 8
          %s1247 = scalar_lea.vmem [#allocation7], %s1246
          %1248 = dma.done %s1244, 128
        $region52: #{tpu_custom_call.1} parent=47 // pred_fallthru
          _
      $region48: #{tpu_custom_call.1} parent=5 // pred_fallthru
        _
    $region6: #{tpu_custom_call.1} parent=1 // loop_footer
      %s21 = sadd.s32 1, %s17
    $region7: #{tpu_custom_call.1} parent=1 // loop_footer_branch
      %16 = sbr.rel target = $region3
    $region8: #{tpu_custom_call.1} parent=1 // loop_exit
      _
    %1249 = vsyncpa [#allocation3], 1
    %s1250 = scalar_lea.sflag [#allocation3], 1
    %1251 = vsyncpa %s1250, 1
    %1252 = vsyncpa [#allocation6], 1
    %s1253 = scalar_lea.sflag [#allocation6], 1
    %1254 = vsyncpa %s1253, 1
    %1255 = vsyncpa [#allocation4], 1
    %s1256 = scalar_lea.sflag [#allocation4], 1
    %1257 = vsyncpa %s1256, 1

</llo_original>
